<compile_context>
chip_gen: v6e
topology: v6e:2x2x1
jax: 0.10.0
libtpu: 0.0.40
codegen_flags: <defaults>
</compile_context>

<pallas_src>
import functools

import numpy as np
import jax
import jax.numpy as jnp
from jax.experimental import pallas as pl
from jax.experimental.pallas import tpu as pltpu


# ----------------------------- in-kernel helpers -----------------------------

def _erf(x):
    # Abramowitz & Stegun 7.1.26 rational approximation (|abs err| < 1.5e-7).
    # 1/(1+p*|x|) via EUP approx reciprocal + one Newton step (~f32 accurate);
    # exp() also runs on the EUP slot.
    a1, a2, a3, a4, a5 = 0.254829592, -0.284496736, 1.421413741, -1.453152027, 1.061405429
    p = 0.3275911
    sgn = jnp.where(x >= 0.0, 1.0, -1.0)
    ax = jnp.abs(x)
    d = 1.0 + p * ax
    t = pl.reciprocal(d, approx=True)
    t = t * (2.0 - d * t)                      # Newton refinement
    poly = ((((a5 * t + a4) * t + a3) * t + a2) * t + a1) * t
    return sgn * (1.0 - poly * jnp.exp(-ax * ax))


def _gelu_exact(x):
    # matches torch.nn.GELU() (erf-based) up to the ~1.5e-7 erf approximation error
    return 0.5 * x * (1.0 + _erf(x * (1.0 / np.sqrt(2.0))))


def _shift_flat(a, off):
    """b[:, p] = a[:, p + off] where p + off is in range, zero otherwise (static off)."""
    if off == 0:
        return a
    z = jnp.zeros((a.shape[0], abs(off)), a.dtype)
    if off > 0:
        return jnp.concatenate([a[:, off:], z], axis=1)
    return jnp.concatenate([z, a[:, :off]], axis=1)


# --------------------------------- kernel ------------------------------------

def dwconv_ffn_kernel(x_ref, w1_ref, b1_ref, w2_ref, shift_ref, w3_ref, b3_ref,
                      o_ref, *, H, W, k):
    N, _, HW = x_ref.shape
    Cm = w1_ref.shape[0]
    pad = k // 2

    w1 = w1_ref[...]            # (Cm, Cin)
    b1 = b1_ref[...]            # (Cm, 1)
    w2 = w2_ref[...]            # (Cm, k*k)   BatchNorm scale already folded in
    shift = shift_ref[...]      # (Cm, 1)     b2*bn_scale + bn_shift (folded)
    w3 = w3_ref[...]            # (Cout, Cm)
    b3 = b3_ref[...]            # (Cout, 1)

    # column index of every flattened spatial position (computed once, reused)
    col = jax.lax.broadcasted_iota(jnp.int32, (1, HW), 1) % W

    for n in range(N):          # tiny batch -> fully unrolled, no grid-step overhead
        x = x_ref[n]            # (Cin, HW) -- HW on the lane axis (dense)

        # --- conv1: 1x1 pointwise conv == (Cm, Cin) @ (Cin, HW) on the MXU ---
        h = jnp.dot(w1, x, preferred_element_type=jnp.float32) + b1          # (Cm, HW)

        # --- conv2: depthwise kxk conv (zero padding k//2) on the flat spatial axis.
        # Source columns that would be read across a row boundary are zeroed once per
        # horizontal offset (hoisted out of the k*k tap loop); vertical out-of-range
        # reads fall into the zero pad of the flat lane shift.
        h_sj = {}
        for sj in range(-pad, pad + 1):
            if sj == 0:
                h_sj[sj] = h
            else:
                keep = (col >= sj) & (col < W + sj)
                h_sj[sj] = jnp.where(keep, h, 0.0)

        acc = jnp.zeros((Cm, HW), jnp.float32)
        for di in range(k):
            si = di - pad
            for dj in range(k):
                sj = dj - pad
                ti = di * k + dj
                tap = w2[:, ti:ti + 1]                                        # (Cm, 1)
                acc = acc + _shift_flat(h_sj[sj], si * W + sj) * tap

        # --- folded BatchNorm(eval) shift (incl. conv2 bias) + GELU ---
        y = _gelu_exact(acc + shift)

        # --- conv3: 1x1 pointwise conv == (Cout, Cm) @ (Cm, HW) on the MXU ---
        out = jnp.dot(w3, y, preferred_element_type=jnp.float32) + b3         # (Cout, HW)
        o_ref[n] = out.astype(o_ref.dtype)


# --------------------------------- wrapper -----------------------------------

def dwconv_ffn(x_nchw, params):
    """Forward pass of DWConvFFN. Input/output are NCHW (PyTorch convention)."""
    x = x_nchw.astype(jnp.float32)
    N, Cin, H, W = x.shape

    w1 = params["w1"].astype(jnp.float32)                  # (Cm, Cin)
    b1 = params["b1"].astype(jnp.float32).reshape(-1, 1)   # (Cm, 1)
    w2 = params["w2"].astype(jnp.float32)                  # (Cm, k, k)
    b2 = params["b2"].astype(jnp.float32)                  # (Cm,)
    scale = params["scale"].astype(jnp.float32)            # (Cm,)  eval-BN scale
    shift = params["shift"].astype(jnp.float32)            # (Cm,)  eval-BN shift
    w3 = params["w3"].astype(jnp.float32)                  # (Cout, Cm)
    b3 = params["b3"].astype(jnp.float32).reshape(-1, 1)   # (Cout, 1)

    Cm, k = w2.shape[0], w2.shape[-1]
    Cout = w3.shape[0]

    # Fold BatchNorm (eval) into the depthwise conv:
    #   (dwconv(h) + b2) * scale + shift == dwconv_{w2*scale}(h) + (b2*scale + shift)
    w2_folded = (w2 * scale[:, None, None]).reshape(Cm, k * k)
    shift_folded = (b2 * scale + shift).reshape(Cm, 1)

    x2d = x.reshape(N, Cin, H * W)                          # free reshape, no transpose
    vmem = pl.BlockSpec(memory_space=pltpu.MemorySpace.VMEM)

    out = pl.pallas_call(
        functools.partial(dwconv_ffn_kernel, H=H, W=W, k=k),
        out_shape=jax.ShapeDtypeStruct((N, Cout, H * W), jnp.float32),
        in_specs=[vmem] * 7,
        out_specs=vmem,
    )(x2d, w1, b1, w2_folded, shift_folded, w3, b3)

    return out.reshape(N, Cout, H, W)                       # free reshape back to NCHW


# ----------------------- deterministic parameter init ------------------------

def init_params(key, in_channels, out_channels, kernel_size, expansion=2):
    Cm = out_channels * expansion
    ks = jax.random.split(key, 10)

    def u(k_, shape, fan_in):
        bound = 1.0 / np.sqrt(fan_in)
        return jax.random.uniform(k_, shape, jnp.float32, -bound, bound)

    # conv1: PyTorch weight (Cm, Cin, 1, 1) -> stored as (Cm, Cin)
    w1 = u(ks[0], (Cm, in_channels), in_channels)
    b1 = u(ks[1], (Cm,), in_channels)
    # conv2 (depthwise): PyTorch weight (Cm, 1, k, k) -> stored as (Cm, k, k)
    w2 = u(ks[2], (Cm, kernel_size, kernel_size), kernel_size * kernel_size)
    b2 = u(ks[3], (Cm,), kernel_size * kernel_size)
    # BatchNorm2d(Cm), eval mode: fold gamma/beta/running stats into scale/shift
    gamma = 1.0 + 0.1 * jax.random.normal(ks[4], (Cm,), jnp.float32)
    beta = 0.1 * jax.random.normal(ks[5], (Cm,), jnp.float32)
    running_mean = 0.1 * jax.random.normal(ks[6], (Cm,), jnp.float32)
    running_var = jnp.abs(jax.random.normal(ks[7], (Cm,), jnp.float32)) + 0.5
    eps = 1e-5
    scale = gamma / jnp.sqrt(running_var + eps)
    shift = beta - running_mean * scale
    # conv3: PyTorch weight (Cout, Cm, 1, 1) -> stored as (Cout, Cm)
    w3 = u(ks[8], (out_channels, Cm), Cm)
    b3 = u(ks[9], (out_channels,), Cm)
    return dict(w1=w1, b1=b1, w2=w2, b2=b2, scale=scale, shift=shift, w3=w3, b3=b3)


# ------------------------------ pure-JAX reference ---------------------------

def reference_forward(x_nchw, p):
    x = x_nchw.astype(jnp.float32)                          # (N, Cin, H, W)
    N, Cin, H, W = x.shape
    k = p["w2"].shape[-1]
    pad = k // 2
    hi = jax.lax.Precision.HIGHEST
    h = jnp.einsum("mc,nchw->nmhw", p["w1"], x, precision=hi) + p["b1"][None, :, None, None]
    hp = jnp.pad(h, ((0, 0), (0, 0), (pad, pad), (pad, pad)))
    acc = jnp.zeros_like(h) + p["b2"][None, :, None, None]
    for di in range(k):
        for dj in range(k):
            acc = acc + hp[:, :, di:di + H, dj:dj + W] * p["w2"][:, di, dj][None, :, None, None]
    y = acc * p["scale"][None, :, None, None] + p["shift"][None, :, None, None]
    y = jax.nn.gelu(y, approximate=False)
    out = jnp.einsum("om,nmhw->nohw", p["w3"], y, precision=hi) + p["b3"][None, :, None, None]
    return out


# ----------------------------------- main ------------------------------------

if __name__ == "__main__":
    key = jax.random.PRNGKey(0)
    kx, kp = jax.random.split(key)

    N, Cin, H, W = 2, 4, 16, 16          # small NCHW input, like the PyTorch module
    Cout, ksz, expansion = 4, 3, 2       # DWConvFFN(4, 4, 3, expansion=2)

    x = jax.random.normal(kx, (N, Cin, H, W), jnp.float32)
    params = init_params(kp, Cin, Cout, ksz, expansion)

    out = jax.block_until_ready(dwconv_ffn(x, params))

    ref = reference_forward(x, params)
    np.testing.assert_allclose(np.asarray(out), np.asarray(ref), rtol=2e-3, atol=2e-3)

    print("KERNEL_OK")
</pallas_src>

<mosaic_0001>
module attributes {stable_mosaic.version = 11 : i64} {
  func.func @dwconv_ffn_kernel(%arg0: memref<2x4x256xf32, #tpu.memory_space<vmem>>, %arg1: memref<8x4xf32, #tpu.memory_space<vmem>>, %arg2: memref<8x1xf32, #tpu.memory_space<vmem>>, %arg3: memref<8x9xf32, #tpu.memory_space<vmem>>, %arg4: memref<8x1xf32, #tpu.memory_space<vmem>>, %arg5: memref<4x8xf32, #tpu.memory_space<vmem>>, %arg6: memref<4x1xf32, #tpu.memory_space<vmem>>, %arg7: memref<2x4x256xf32, #tpu.memory_space<vmem>>) attributes {dimension_semantics = [], scalar_prefetch = 0 : i64, scratch_operands = 0 : i64, tpu.core_type = #tpu.core_type<tc>} {
    %c0 = arith.constant 0 : index
    %c0_0 = arith.constant 0 : index
    %0 = vector.load %arg1[%c0, %c0_0] : memref<8x4xf32, #tpu.memory_space<vmem>>, vector<8x4xf32>
    %c0_1 = arith.constant 0 : index
    %c0_2 = arith.constant 0 : index
    %1 = vector.load %arg2[%c0_1, %c0_2] : memref<8x1xf32, #tpu.memory_space<vmem>>, vector<8x1xf32>
    %c0_3 = arith.constant 0 : index
    %c0_4 = arith.constant 0 : index
    %2 = vector.load %arg3[%c0_3, %c0_4] : memref<8x9xf32, #tpu.memory_space<vmem>>, vector<8x9xf32>
    %c0_5 = arith.constant 0 : index
    %c0_6 = arith.constant 0 : index
    %3 = vector.load %arg4[%c0_5, %c0_6] : memref<8x1xf32, #tpu.memory_space<vmem>>, vector<8x1xf32>
    %c0_7 = arith.constant 0 : index
    %c0_8 = arith.constant 0 : index
    %4 = vector.load %arg5[%c0_7, %c0_8] : memref<4x8xf32, #tpu.memory_space<vmem>>, vector<4x8xf32>
    %c0_9 = arith.constant 0 : index
    %c0_10 = arith.constant 0 : index
    %5 = vector.load %arg6[%c0_9, %c0_10] : memref<4x1xf32, #tpu.memory_space<vmem>>, vector<4x1xf32>
    %6 = tpu.iota {dimensions = array<i32: 1>} : vector<1x256xi32>
    %c16_i32 = arith.constant 16 : i32
    %c0_i32 = arith.constant 0 : i32
    %7 = arith.cmpi eq, %c16_i32, %c0_i32 : i32
    %c1_i32 = arith.constant 1 : i32
    %8 = arith.select %7, %c1_i32, %c16_i32 : i32
    %9 = vector.broadcast %8 : i32 to vector<1x256xi32>
    %10 = arith.remsi %6, %9 : vector<1x256xi32>
    %c0_i32_11 = arith.constant 0 : i32
    %11 = vector.broadcast %c0_i32_11 : i32 to vector<1x256xi32>
    %12 = arith.cmpi ne, %10, %11 : vector<1x256xi32>
    %c0_i32_12 = arith.constant 0 : i32
    %13 = vector.broadcast %c0_i32_12 : i32 to vector<1x256xi32>
    %14 = arith.cmpi slt, %10, %13 : vector<1x256xi32>
    %c0_i32_13 = arith.constant 0 : i32
    %15 = arith.cmpi slt, %8, %c0_i32_13 : i32
    %16 = vector.broadcast %15 : i1 to vector<1x256xi1>
    %17 = vector.broadcast %16 : vector<1x256xi1> to vector<1x256xi1>
    %18 = arith.xori %14, %17 : vector<1x256xi1>
    %19 = arith.andi %18, %12 : vector<1x256xi1>
    %20 = vector.broadcast %8 : i32 to vector<1x256xi32>
    %21 = arith.addi %10, %20 : vector<1x256xi32>
    %22 = arith.select %19, %21, %10 : vector<1x256xi1>, vector<1x256xi32>
    %c0_14 = arith.constant 0 : index
    %c0_15 = arith.constant 0 : index
    %c0_16 = arith.constant 0 : index
    %23 = vector.load %arg0[%c0_14, %c0_15, %c0_16] : memref<2x4x256xf32, #tpu.memory_space<vmem>>, vector<1x4x256xf32>
    %24 = vector.shape_cast %23 : vector<1x4x256xf32> to vector<4x256xf32>
    %cst = arith.constant dense<0.000000e+00> : vector<8x256xf32>
    %25 = tpu.matmul %0, %24, %cst {dimension_numbers = #tpu.dot_dimension_numbers<[1], [0], [0], [1], [0, 0, 1, 1], [], []>} : vector<8x4xf32>, vector<4x256xf32>, vector<8x256xf32> -> vector<8x256xf32>
    %26 = vector.broadcast %1 : vector<8x1xf32> to vector<8x256xf32>
    %27 = arith.addf %25, %26 : vector<8x256xf32>
    %c-1_i32 = arith.constant -1 : i32
    %28 = vector.broadcast %c-1_i32 : i32 to vector<1x256xi32>
    %29 = arith.cmpi sge, %22, %28 : vector<1x256xi32>
    %c15_i32 = arith.constant 15 : i32
    %30 = vector.broadcast %c15_i32 : i32 to vector<1x256xi32>
    %31 = arith.cmpi slt, %22, %30 : vector<1x256xi32>
    %32 = arith.andi %29, %31 : vector<1x256xi1>
    %cst_17 = arith.constant 0.000000e+00 : f32
    %33 = vector.shape_cast %32 : vector<1x256xi1> to vector<1x256xi1>
    %34 = vector.broadcast %33 : vector<1x256xi1> to vector<8x256xi1>
    %35 = vector.broadcast %cst_17 : f32 to vector<8x256xf32>
    %36 = arith.select %34, %27, %35 : vector<8x256xi1>, vector<8x256xf32>
    %c1_i32_18 = arith.constant 1 : i32
    %37 = vector.broadcast %c1_i32_18 : i32 to vector<1x256xi32>
    %38 = arith.cmpi sge, %22, %37 : vector<1x256xi32>
    %c17_i32 = arith.constant 17 : i32
    %39 = vector.broadcast %c17_i32 : i32 to vector<1x256xi32>
    %40 = arith.cmpi slt, %22, %39 : vector<1x256xi32>
    %41 = arith.andi %38, %40 : vector<1x256xi1>
    %cst_19 = arith.constant 0.000000e+00 : f32
    %42 = vector.shape_cast %41 : vector<1x256xi1> to vector<1x256xi1>
    %43 = vector.broadcast %42 : vector<1x256xi1> to vector<8x256xi1>
    %44 = vector.broadcast %cst_19 : f32 to vector<8x256xf32>
    %45 = arith.select %43, %27, %44 : vector<8x256xi1>, vector<8x256xf32>
    %cst_20 = arith.constant 0.000000e+00 : f32
    %46 = vector.broadcast %cst_20 : f32 to vector<8x256xf32>
    %47 = vector.extract_strided_slice %2 {offsets = [0, 0], sizes = [8, 1], strides = [1, 1]} : vector<8x9xf32> to vector<8x1xf32>
    %cst_21 = arith.constant 0.000000e+00 : f32
    %48 = vector.broadcast %cst_21 : f32 to vector<8x17xf32>
    %49 = vector.extract_strided_slice %36 {offsets = [0, 0], sizes = [8, 239], strides = [1, 1]} : vector<8x256xf32> to vector<8x239xf32>
    %50 = tpu.concatenate %48, %49 in 1 : vector<8x17xf32>, vector<8x239xf32> -> vector<8x256xf32>
    %51 = vector.broadcast %47 : vector<8x1xf32> to vector<8x256xf32>
    %52 = arith.mulf %50, %51 : vector<8x256xf32>
    %53 = arith.addf %46, %52 : vector<8x256xf32>
    %54 = vector.extract_strided_slice %2 {offsets = [0, 1], sizes = [8, 1], strides = [1, 1]} : vector<8x9xf32> to vector<8x1xf32>
    %cst_22 = arith.constant 0.000000e+00 : f32
    %55 = vector.broadcast %cst_22 : f32 to vector<8x16xf32>
    %56 = vector.extract_strided_slice %27 {offsets = [0, 0], sizes = [8, 240], strides = [1, 1]} : vector<8x256xf32> to vector<8x240xf32>
    %57 = tpu.concatenate %55, %56 in 1 : vector<8x16xf32>, vector<8x240xf32> -> vector<8x256xf32>
    %58 = vector.broadcast %54 : vector<8x1xf32> to vector<8x256xf32>
    %59 = arith.mulf %57, %58 : vector<8x256xf32>
    %60 = arith.addf %53, %59 : vector<8x256xf32>
    %61 = vector.extract_strided_slice %2 {offsets = [0, 2], sizes = [8, 1], strides = [1, 1]} : vector<8x9xf32> to vector<8x1xf32>
    %cst_23 = arith.constant 0.000000e+00 : f32
    %62 = vector.broadcast %cst_23 : f32 to vector<8x15xf32>
    %63 = vector.extract_strided_slice %45 {offsets = [0, 0], sizes = [8, 241], strides = [1, 1]} : vector<8x256xf32> to vector<8x241xf32>
    %64 = tpu.concatenate %62, %63 in 1 : vector<8x15xf32>, vector<8x241xf32> -> vector<8x256xf32>
    %65 = vector.broadcast %61 : vector<8x1xf32> to vector<8x256xf32>
    %66 = arith.mulf %64, %65 : vector<8x256xf32>
    %67 = arith.addf %60, %66 : vector<8x256xf32>
    %68 = vector.extract_strided_slice %2 {offsets = [0, 3], sizes = [8, 1], strides = [1, 1]} : vector<8x9xf32> to vector<8x1xf32>
    %cst_24 = arith.constant 0.000000e+00 : f32
    %69 = vector.broadcast %cst_24 : f32 to vector<8x1xf32>
    %70 = vector.extract_strided_slice %36 {offsets = [0, 0], sizes = [8, 255], strides = [1, 1]} : vector<8x256xf32> to vector<8x255xf32>
    %71 = tpu.concatenate %69, %70 in 1 : vector<8x1xf32>, vector<8x255xf32> -> vector<8x256xf32>
    %72 = vector.broadcast %68 : vector<8x1xf32> to vector<8x256xf32>
    %73 = arith.mulf %71, %72 : vector<8x256xf32>
    %74 = arith.addf %67, %73 : vector<8x256xf32>
    %75 = vector.extract_strided_slice %2 {offsets = [0, 4], sizes = [8, 1], strides = [1, 1]} : vector<8x9xf32> to vector<8x1xf32>
    %76 = vector.broadcast %75 : vector<8x1xf32> to vector<8x256xf32>
    %77 = arith.mulf %27, %76 : vector<8x256xf32>
    %78 = arith.addf %74, %77 : vector<8x256xf32>
    %79 = vector.extract_strided_slice %2 {offsets = [0, 5], sizes = [8, 1], strides = [1, 1]} : vector<8x9xf32> to vector<8x1xf32>
    %cst_25 = arith.constant 0.000000e+00 : f32
    %80 = vector.broadcast %cst_25 : f32 to vector<8x1xf32>
    %81 = vector.extract_strided_slice %45 {offsets = [0, 1], sizes = [8, 255], strides = [1, 1]} : vector<8x256xf32> to vector<8x255xf32>
    %82 = tpu.concatenate %81, %80 in 1 : vector<8x255xf32>, vector<8x1xf32> -> vector<8x256xf32>
    %83 = vector.broadcast %79 : vector<8x1xf32> to vector<8x256xf32>
    %84 = arith.mulf %82, %83 : vector<8x256xf32>
    %85 = arith.addf %78, %84 : vector<8x256xf32>
    %86 = vector.extract_strided_slice %2 {offsets = [0, 6], sizes = [8, 1], strides = [1, 1]} : vector<8x9xf32> to vector<8x1xf32>
    %cst_26 = arith.constant 0.000000e+00 : f32
    %87 = vector.broadcast %cst_26 : f32 to vector<8x15xf32>
    %88 = vector.extract_strided_slice %36 {offsets = [0, 15], sizes = [8, 241], strides = [1, 1]} : vector<8x256xf32> to vector<8x241xf32>
    %89 = tpu.concatenate %88, %87 in 1 : vector<8x241xf32>, vector<8x15xf32> -> vector<8x256xf32>
    %90 = vector.broadcast %86 : vector<8x1xf32> to vector<8x256xf32>
    %91 = arith.mulf %89, %90 : vector<8x256xf32>
    %92 = arith.addf %85, %91 : vector<8x256xf32>
    %93 = vector.extract_strided_slice %2 {offsets = [0, 7], sizes = [8, 1], strides = [1, 1]} : vector<8x9xf32> to vector<8x1xf32>
    %cst_27 = arith.constant 0.000000e+00 : f32
    %94 = vector.broadcast %cst_27 : f32 to vector<8x16xf32>
    %95 = vector.extract_strided_slice %27 {offsets = [0, 16], sizes = [8, 240], strides = [1, 1]} : vector<8x256xf32> to vector<8x240xf32>
    %96 = tpu.concatenate %95, %94 in 1 : vector<8x240xf32>, vector<8x16xf32> -> vector<8x256xf32>
    %97 = vector.broadcast %93 : vector<8x1xf32> to vector<8x256xf32>
    %98 = arith.mulf %96, %97 : vector<8x256xf32>
    %99 = arith.addf %92, %98 : vector<8x256xf32>
    %100 = vector.extract_strided_slice %2 {offsets = [0, 8], sizes = [8, 1], strides = [1, 1]} : vector<8x9xf32> to vector<8x1xf32>
    %cst_28 = arith.constant 0.000000e+00 : f32
    %101 = vector.broadcast %cst_28 : f32 to vector<8x17xf32>
    %102 = vector.extract_strided_slice %45 {offsets = [0, 17], sizes = [8, 239], strides = [1, 1]} : vector<8x256xf32> to vector<8x239xf32>
    %103 = tpu.concatenate %102, %101 in 1 : vector<8x239xf32>, vector<8x17xf32> -> vector<8x256xf32>
    %104 = vector.broadcast %100 : vector<8x1xf32> to vector<8x256xf32>
    %105 = arith.mulf %103, %104 : vector<8x256xf32>
    %106 = arith.addf %99, %105 : vector<8x256xf32>
    %107 = vector.broadcast %3 : vector<8x1xf32> to vector<8x256xf32>
    %108 = arith.addf %106, %107 : vector<8x256xf32>
    %cst_29 = arith.constant 5.000000e-01 : f32
    %109 = vector.broadcast %cst_29 : f32 to vector<8x256xf32>
    %110 = arith.mulf %109, %108 : vector<8x256xf32>
    %cst_30 = arith.constant 0.707106769 : f32
    %111 = vector.broadcast %cst_30 : f32 to vector<8x256xf32>
    %112 = arith.mulf %108, %111 : vector<8x256xf32>
    %cst_31 = arith.constant 0.000000e+00 : f32
    %113 = vector.broadcast %cst_31 : f32 to vector<8x256xf32>
    %114 = arith.cmpf oge, %112, %113 : vector<8x256xf32>
    %cst_32 = arith.constant 1.000000e+00 : f32
    %cst_33 = arith.constant -1.000000e+00 : f32
    %115 = vector.broadcast %cst_32 : f32 to vector<8x256xf32>
    %116 = vector.broadcast %cst_33 : f32 to vector<8x256xf32>
    %117 = arith.select %114, %115, %116 : vector<8x256xi1>, vector<8x256xf32>
    %118 = math.absf %112 : vector<8x256xf32>
    %cst_34 = arith.constant 0.327591091 : f32
    %119 = vector.broadcast %cst_34 : f32 to vector<8x256xf32>
    %120 = arith.mulf %119, %118 : vector<8x256xf32>
    %cst_35 = arith.constant 1.000000e+00 : f32
    %121 = vector.broadcast %cst_35 : f32 to vector<8x256xf32>
    %122 = arith.addf %121, %120 : vector<8x256xf32>
    %123 = tpu.reciprocal %122 {approx = true} : vector<8x256xf32> -> vector<8x256xf32>
    %124 = arith.mulf %122, %123 : vector<8x256xf32>
    %cst_36 = arith.constant 2.000000e+00 : f32
    %125 = vector.broadcast %cst_36 : f32 to vector<8x256xf32>
    %126 = arith.subf %125, %124 : vector<8x256xf32>
    %127 = arith.mulf %123, %126 : vector<8x256xf32>
    %cst_37 = arith.constant 1.06140542 : f32
    %128 = vector.broadcast %cst_37 : f32 to vector<8x256xf32>
    %129 = arith.mulf %128, %127 : vector<8x256xf32>
    %cst_38 = arith.constant -1.45315206 : f32
    %130 = vector.broadcast %cst_38 : f32 to vector<8x256xf32>
    %131 = arith.addf %129, %130 : vector<8x256xf32>
    %132 = arith.mulf %131, %127 : vector<8x256xf32>
    %cst_39 = arith.constant 1.42141378 : f32
    %133 = vector.broadcast %cst_39 : f32 to vector<8x256xf32>
    %134 = arith.addf %132, %133 : vector<8x256xf32>
    %135 = arith.mulf %134, %127 : vector<8x256xf32>
    %cst_40 = arith.constant -0.284496725 : f32
    %136 = vector.broadcast %cst_40 : f32 to vector<8x256xf32>
    %137 = arith.addf %135, %136 : vector<8x256xf32>
    %138 = arith.mulf %137, %127 : vector<8x256xf32>
    %cst_41 = arith.constant 0.254829586 : f32
    %139 = vector.broadcast %cst_41 : f32 to vector<8x256xf32>
    %140 = arith.addf %138, %139 : vector<8x256xf32>
    %141 = arith.mulf %140, %127 : vector<8x256xf32>
    %cst_42 = arith.constant 0.000000e+00 : f32
    %142 = vector.broadcast %cst_42 : f32 to vector<8x256xf32>
    %143 = arith.subf %142, %118 : vector<8x256xf32>
    %144 = arith.mulf %143, %118 : vector<8x256xf32>
    %145 = math.exp %144 : vector<8x256xf32>
    %146 = arith.mulf %141, %145 : vector<8x256xf32>
    %cst_43 = arith.constant 1.000000e+00 : f32
    %147 = vector.broadcast %cst_43 : f32 to vector<8x256xf32>
    %148 = arith.subf %147, %146 : vector<8x256xf32>
    %149 = arith.mulf %117, %148 : vector<8x256xf32>
    %cst_44 = arith.constant 1.000000e+00 : f32
    %150 = vector.broadcast %cst_44 : f32 to vector<8x256xf32>
    %151 = arith.addf %150, %149 : vector<8x256xf32>
    %152 = arith.mulf %110, %151 : vector<8x256xf32>
    %cst_45 = arith.constant dense<0.000000e+00> : vector<4x256xf32>
    %153 = tpu.matmul %4, %152, %cst_45 {dimension_numbers = #tpu.dot_dimension_numbers<[1], [0], [0], [1], [0, 0, 1, 1], [], []>} : vector<4x8xf32>, vector<8x256xf32>, vector<4x256xf32> -> vector<4x256xf32>
    %154 = vector.broadcast %5 : vector<4x1xf32> to vector<4x256xf32>
    %155 = arith.addf %153, %154 : vector<4x256xf32>
    %c0_46 = arith.constant 0 : index
    %c0_47 = arith.constant 0 : index
    %c0_48 = arith.constant 0 : index
    %156 = vector.load %arg7[%c0_46, %c0_47, %c0_48] : memref<2x4x256xf32, #tpu.memory_space<vmem>>, vector<1x4x256xf32>
    %157 = vector.shape_cast %156 : vector<1x4x256xf32> to vector<4x256xf32>
    %158 = vector.shape_cast %155 : vector<4x256xf32> to vector<1x4x256xf32>
    tpu.vector_store %arg7[%c0_46, %c0_47, %c0_48], %158 {strides = array<i32>} : memref<2x4x256xf32, #tpu.memory_space<vmem>>, vector<1x4x256xf32>,
    %c1 = arith.constant 1 : index
    %c0_49 = arith.constant 0 : index
    %c0_50 = arith.constant 0 : index
    %159 = vector.load %arg0[%c1, %c0_49, %c0_50] : memref<2x4x256xf32, #tpu.memory_space<vmem>>, vector<1x4x256xf32>
    %160 = vector.shape_cast %159 : vector<1x4x256xf32> to vector<4x256xf32>
    %cst_51 = arith.constant dense<0.000000e+00> : vector<8x256xf32>
    %161 = tpu.matmul %0, %160, %cst_51 {dimension_numbers = #tpu.dot_dimension_numbers<[1], [0], [0], [1], [0, 0, 1, 1], [], []>} : vector<8x4xf32>, vector<4x256xf32>, vector<8x256xf32> -> vector<8x256xf32>
    %162 = vector.broadcast %1 : vector<8x1xf32> to vector<8x256xf32>
    %163 = arith.addf %161, %162 : vector<8x256xf32>
    %c-1_i32_52 = arith.constant -1 : i32
    %164 = vector.broadcast %c-1_i32_52 : i32 to vector<1x256xi32>
    %165 = arith.cmpi sge, %22, %164 : vector<1x256xi32>
    %c15_i32_53 = arith.constant 15 : i32
    %166 = vector.broadcast %c15_i32_53 : i32 to vector<1x256xi32>
    %167 = arith.cmpi slt, %22, %166 : vector<1x256xi32>
    %168 = arith.andi %165, %167 : vector<1x256xi1>
    %cst_54 = arith.constant 0.000000e+00 : f32
    %169 = vector.shape_cast %168 : vector<1x256xi1> to vector<1x256xi1>
    %170 = vector.broadcast %169 : vector<1x256xi1> to vector<8x256xi1>
    %171 = vector.broadcast %cst_54 : f32 to vector<8x256xf32>
    %172 = arith.select %170, %163, %171 : vector<8x256xi1>, vector<8x256xf32>
    %c1_i32_55 = arith.constant 1 : i32
    %173 = vector.broadcast %c1_i32_55 : i32 to vector<1x256xi32>
    %174 = arith.cmpi sge, %22, %173 : vector<1x256xi32>
    %c17_i32_56 = arith.constant 17 : i32
    %175 = vector.broadcast %c17_i32_56 : i32 to vector<1x256xi32>
    %176 = arith.cmpi slt, %22, %175 : vector<1x256xi32>
    %177 = arith.andi %174, %176 : vector<1x256xi1>
    %cst_57 = arith.constant 0.000000e+00 : f32
    %178 = vector.shape_cast %177 : vector<1x256xi1> to vector<1x256xi1>
    %179 = vector.broadcast %178 : vector<1x256xi1> to vector<8x256xi1>
    %180 = vector.broadcast %cst_57 : f32 to vector<8x256xf32>
    %181 = arith.select %179, %163, %180 : vector<8x256xi1>, vector<8x256xf32>
    %cst_58 = arith.constant 0.000000e+00 : f32
    %182 = vector.broadcast %cst_58 : f32 to vector<8x256xf32>
    %183 = vector.extract_strided_slice %2 {offsets = [0, 0], sizes = [8, 1], strides = [1, 1]} : vector<8x9xf32> to vector<8x1xf32>
    %cst_59 = arith.constant 0.000000e+00 : f32
    %184 = vector.broadcast %cst_59 : f32 to vector<8x17xf32>
    %185 = vector.extract_strided_slice %172 {offsets = [0, 0], sizes = [8, 239], strides = [1, 1]} : vector<8x256xf32> to vector<8x239xf32>
    %186 = tpu.concatenate %184, %185 in 1 : vector<8x17xf32>, vector<8x239xf32> -> vector<8x256xf32>
    %187 = vector.broadcast %183 : vector<8x1xf32> to vector<8x256xf32>
    %188 = arith.mulf %186, %187 : vector<8x256xf32>
    %189 = arith.addf %182, %188 : vector<8x256xf32>
    %190 = vector.extract_strided_slice %2 {offsets = [0, 1], sizes = [8, 1], strides = [1, 1]} : vector<8x9xf32> to vector<8x1xf32>
    %cst_60 = arith.constant 0.000000e+00 : f32
    %191 = vector.broadcast %cst_60 : f32 to vector<8x16xf32>
    %192 = vector.extract_strided_slice %163 {offsets = [0, 0], sizes = [8, 240], strides = [1, 1]} : vector<8x256xf32> to vector<8x240xf32>
    %193 = tpu.concatenate %191, %192 in 1 : vector<8x16xf32>, vector<8x240xf32> -> vector<8x256xf32>
    %194 = vector.broadcast %190 : vector<8x1xf32> to vector<8x256xf32>
    %195 = arith.mulf %193, %194 : vector<8x256xf32>
    %196 = arith.addf %189, %195 : vector<8x256xf32>
    %197 = vector.extract_strided_slice %2 {offsets = [0, 2], sizes = [8, 1], strides = [1, 1]} : vector<8x9xf32> to vector<8x1xf32>
    %cst_61 = arith.constant 0.000000e+00 : f32
    %198 = vector.broadcast %cst_61 : f32 to vector<8x15xf32>
    %199 = vector.extract_strided_slice %181 {offsets = [0, 0], sizes = [8, 241], strides = [1, 1]} : vector<8x256xf32> to vector<8x241xf32>
    %200 = tpu.concatenate %198, %199 in 1 : vector<8x15xf32>, vector<8x241xf32> -> vector<8x256xf32>
    %201 = vector.broadcast %197 : vector<8x1xf32> to vector<8x256xf32>
    %202 = arith.mulf %200, %201 : vector<8x256xf32>
    %203 = arith.addf %196, %202 : vector<8x256xf32>
    %204 = vector.extract_strided_slice %2 {offsets = [0, 3], sizes = [8, 1], strides = [1, 1]} : vector<8x9xf32> to vector<8x1xf32>
    %cst_62 = arith.constant 0.000000e+00 : f32
    %205 = vector.broadcast %cst_62 : f32 to vector<8x1xf32>
    %206 = vector.extract_strided_slice %172 {offsets = [0, 0], sizes = [8, 255], strides = [1, 1]} : vector<8x256xf32> to vector<8x255xf32>
    %207 = tpu.concatenate %205, %206 in 1 : vector<8x1xf32>, vector<8x255xf32> -> vector<8x256xf32>
    %208 = vector.broadcast %204 : vector<8x1xf32> to vector<8x256xf32>
    %209 = arith.mulf %207, %208 : vector<8x256xf32>
    %210 = arith.addf %203, %209 : vector<8x256xf32>
    %211 = vector.extract_strided_slice %2 {offsets = [0, 4], sizes = [8, 1], strides = [1, 1]} : vector<8x9xf32> to vector<8x1xf32>
    %212 = vector.broadcast %211 : vector<8x1xf32> to vector<8x256xf32>
    %213 = arith.mulf %163, %212 : vector<8x256xf32>
    %214 = arith.addf %210, %213 : vector<8x256xf32>
    %215 = vector.extract_strided_slice %2 {offsets = [0, 5], sizes = [8, 1], strides = [1, 1]} : vector<8x9xf32> to vector<8x1xf32>
    %cst_63 = arith.constant 0.000000e+00 : f32
    %216 = vector.broadcast %cst_63 : f32 to vector<8x1xf32>
    %217 = vector.extract_strided_slice %181 {offsets = [0, 1], sizes = [8, 255], strides = [1, 1]} : vector<8x256xf32> to vector<8x255xf32>
    %218 = tpu.concatenate %217, %216 in 1 : vector<8x255xf32>, vector<8x1xf32> -> vector<8x256xf32>
    %219 = vector.broadcast %215 : vector<8x1xf32> to vector<8x256xf32>
    %220 = arith.mulf %218, %219 : vector<8x256xf32>
    %221 = arith.addf %214, %220 : vector<8x256xf32>
    %222 = vector.extract_strided_slice %2 {offsets = [0, 6], sizes = [8, 1], strides = [1, 1]} : vector<8x9xf32> to vector<8x1xf32>
    %cst_64 = arith.constant 0.000000e+00 : f32
    %223 = vector.broadcast %cst_64 : f32 to vector<8x15xf32>
    %224 = vector.extract_strided_slice %172 {offsets = [0, 15], sizes = [8, 241], strides = [1, 1]} : vector<8x256xf32> to vector<8x241xf32>
    %225 = tpu.concatenate %224, %223 in 1 : vector<8x241xf32>, vector<8x15xf32> -> vector<8x256xf32>
    %226 = vector.broadcast %222 : vector<8x1xf32> to vector<8x256xf32>
    %227 = arith.mulf %225, %226 : vector<8x256xf32>
    %228 = arith.addf %221, %227 : vector<8x256xf32>
    %229 = vector.extract_strided_slice %2 {offsets = [0, 7], sizes = [8, 1], strides = [1, 1]} : vector<8x9xf32> to vector<8x1xf32>
    %cst_65 = arith.constant 0.000000e+00 : f32
    %230 = vector.broadcast %cst_65 : f32 to vector<8x16xf32>
    %231 = vector.extract_strided_slice %163 {offsets = [0, 16], sizes = [8, 240], strides = [1, 1]} : vector<8x256xf32> to vector<8x240xf32>
    %232 = tpu.concatenate %231, %230 in 1 : vector<8x240xf32>, vector<8x16xf32> -> vector<8x256xf32>
    %233 = vector.broadcast %229 : vector<8x1xf32> to vector<8x256xf32>
    %234 = arith.mulf %232, %233 : vector<8x256xf32>
    %235 = arith.addf %228, %234 : vector<8x256xf32>
    %236 = vector.extract_strided_slice %2 {offsets = [0, 8], sizes = [8, 1], strides = [1, 1]} : vector<8x9xf32> to vector<8x1xf32>
    %cst_66 = arith.constant 0.000000e+00 : f32
    %237 = vector.broadcast %cst_66 : f32 to vector<8x17xf32>
    %238 = vector.extract_strided_slice %181 {offsets = [0, 17], sizes = [8, 239], strides = [1, 1]} : vector<8x256xf32> to vector<8x239xf32>
    %239 = tpu.concatenate %238, %237 in 1 : vector<8x239xf32>, vector<8x17xf32> -> vector<8x256xf32>
    %240 = vector.broadcast %236 : vector<8x1xf32> to vector<8x256xf32>
    %241 = arith.mulf %239, %240 : vector<8x256xf32>
    %242 = arith.addf %235, %241 : vector<8x256xf32>
    %243 = vector.broadcast %3 : vector<8x1xf32> to vector<8x256xf32>
    %244 = arith.addf %242, %243 : vector<8x256xf32>
    %cst_67 = arith.constant 5.000000e-01 : f32
    %245 = vector.broadcast %cst_67 : f32 to vector<8x256xf32>
    %246 = arith.mulf %245, %244 : vector<8x256xf32>
    %cst_68 = arith.constant 0.707106769 : f32
    %247 = vector.broadcast %cst_68 : f32 to vector<8x256xf32>
    %248 = arith.mulf %244, %247 : vector<8x256xf32>
    %cst_69 = arith.constant 0.000000e+00 : f32
    %249 = vector.broadcast %cst_69 : f32 to vector<8x256xf32>
    %250 = arith.cmpf oge, %248, %249 : vector<8x256xf32>
    %cst_70 = arith.constant 1.000000e+00 : f32
    %cst_71 = arith.constant -1.000000e+00 : f32
    %251 = vector.broadcast %cst_70 : f32 to vector<8x256xf32>
    %252 = vector.broadcast %cst_71 : f32 to vector<8x256xf32>
    %253 = arith.select %250, %251, %252 : vector<8x256xi1>, vector<8x256xf32>
    %254 = math.absf %248 : vector<8x256xf32>
    %cst_72 = arith.constant 0.327591091 : f32
    %255 = vector.broadcast %cst_72 : f32 to vector<8x256xf32>
    %256 = arith.mulf %255, %254 : vector<8x256xf32>
    %cst_73 = arith.constant 1.000000e+00 : f32
    %257 = vector.broadcast %cst_73 : f32 to vector<8x256xf32>
    %258 = arith.addf %257, %256 : vector<8x256xf32>
    %259 = tpu.reciprocal %258 {approx = true} : vector<8x256xf32> -> vector<8x256xf32>
    %260 = arith.mulf %258, %259 : vector<8x256xf32>
    %cst_74 = arith.constant 2.000000e+00 : f32
    %261 = vector.broadcast %cst_74 : f32 to vector<8x256xf32>
    %262 = arith.subf %261, %260 : vector<8x256xf32>
    %263 = arith.mulf %259, %262 : vector<8x256xf32>
    %cst_75 = arith.constant 1.06140542 : f32
    %264 = vector.broadcast %cst_75 : f32 to vector<8x256xf32>
    %265 = arith.mulf %264, %263 : vector<8x256xf32>
    %cst_76 = arith.constant -1.45315206 : f32
    %266 = vector.broadcast %cst_76 : f32 to vector<8x256xf32>
    %267 = arith.addf %265, %266 : vector<8x256xf32>
    %268 = arith.mulf %267, %263 : vector<8x256xf32>
    %cst_77 = arith.constant 1.42141378 : f32
    %269 = vector.broadcast %cst_77 : f32 to vector<8x256xf32>
    %270 = arith.addf %268, %269 : vector<8x256xf32>
    %271 = arith.mulf %270, %263 : vector<8x256xf32>
    %cst_78 = arith.constant -0.284496725 : f32
    %272 = vector.broadcast %cst_78 : f32 to vector<8x256xf32>
    %273 = arith.addf %271, %272 : vector<8x256xf32>
    %274 = arith.mulf %273, %263 : vector<8x256xf32>
    %cst_79 = arith.constant 0.254829586 : f32
    %275 = vector.broadcast %cst_79 : f32 to vector<8x256xf32>
    %276 = arith.addf %274, %275 : vector<8x256xf32>
    %277 = arith.mulf %276, %263 : vector<8x256xf32>
    %cst_80 = arith.constant 0.000000e+00 : f32
    %278 = vector.broadcast %cst_80 : f32 to vector<8x256xf32>
    %279 = arith.subf %278, %254 : vector<8x256xf32>
    %280 = arith.mulf %279, %254 : vector<8x256xf32>
    %281 = math.exp %280 : vector<8x256xf32>
    %282 = arith.mulf %277, %281 : vector<8x256xf32>
    %cst_81 = arith.constant 1.000000e+00 : f32
    %283 = vector.broadcast %cst_81 : f32 to vector<8x256xf32>
    %284 = arith.subf %283, %282 : vector<8x256xf32>
    %285 = arith.mulf %253, %284 : vector<8x256xf32>
    %cst_82 = arith.constant 1.000000e+00 : f32
    %286 = vector.broadcast %cst_82 : f32 to vector<8x256xf32>
    %287 = arith.addf %286, %285 : vector<8x256xf32>
    %288 = arith.mulf %246, %287 : vector<8x256xf32>
    %cst_83 = arith.constant dense<0.000000e+00> : vector<4x256xf32>
    %289 = tpu.matmul %4, %288, %cst_83 {dimension_numbers = #tpu.dot_dimension_numbers<[1], [0], [0], [1], [0, 0, 1, 1], [], []>} : vector<4x8xf32>, vector<8x256xf32>, vector<4x256xf32> -> vector<4x256xf32>
    %290 = vector.broadcast %5 : vector<4x1xf32> to vector<4x256xf32>
    %291 = arith.addf %289, %290 : vector<4x256xf32>
    %c1_84 = arith.constant 1 : index
    %c0_85 = arith.constant 0 : index
    %c0_86 = arith.constant 0 : index
    %292 = vector.load %arg7[%c1_84, %c0_85, %c0_86] : memref<2x4x256xf32, #tpu.memory_space<vmem>>, vector<1x4x256xf32>
    %293 = vector.shape_cast %292 : vector<1x4x256xf32> to vector<4x256xf32>
    %294 = vector.shape_cast %291 : vector<4x256xf32> to vector<1x4x256xf32>
    tpu.vector_store %arg7[%c1_84, %c0_85, %c0_86], %294 {strides = array<i32>} : memref<2x4x256xf32, #tpu.memory_space<vmem>>, vector<1x4x256xf32>,
    return
  }
}

</mosaic_0001>

<llo_original>
// kernel: tpu_custom_call.1
$region0: #{tpu_custom_call.1}
  #allocation0 [shape = 'u32[]', space=smem, size = 0x4, offset = 0x4, fixed_abs, tag = 'smem constant byte address 0x4 - core index']
  #allocation1 [shape = 'u32[144,128]{1,0:T(1,128)}', space=vmem, size = 0x12000, scoped, tag = 'internal scratch']
  %s0 = inlined_call_operand.vmem [shape: f32[2,4,256], index: 0, kind: input, shape index: {}]
  %s1 = inlined_call_operand.vmem [shape: f32[8,4], index: 1, kind: input, shape index: {}]
  %s2 = inlined_call_operand.vmem [shape: f32[8,1], index: 2, kind: input, shape index: {}]
  %s3 = inlined_call_operand.vmem [shape: f32[8,9], index: 3, kind: input, shape index: {}]
  %s4 = inlined_call_operand.vmem [shape: f32[8,1], index: 4, kind: input, shape index: {}]
  %s5 = inlined_call_operand.vmem [shape: f32[4,8], index: 5, kind: input, shape index: {}]
  %s6 = inlined_call_operand.vmem [shape: f32[4,1], index: 6, kind: input, shape index: {}]
  %s7 = inlined_call_operand.hbm [shape: f32[2,4,256], index: 7, kind: output, shape index: {}]
  %s8 = sld [smem:[#allocation0]]
  $region38: #{tpu_custom_call.1} parent=0
    _
  %s10 = ssub.s32 1, %s8
  %s11 = scalar_select 0, %s10, %s8
  $region1: #{tpu_custom_call.1} parent=0
    #allocation2 [shape = 'u8[8192]{0}', space=vmem, size = 0x2000, scoped, tag = 'output window, operand 0, single buffered']
    #allocation3 [shape = 's32[1]{0}', space=sflag, size = 0x4, scoped, tag = 'scoped memory for tpu_custom_call.1']
    %12 = vsyncpa [#allocation3], 0
    // Predicated region
    $region2: #{tpu_custom_call.1} parent=1 // pred_check
      _
    $region3: #{tpu_custom_call.1} parent=1 // pred_check_branch
      %14 = sbr.rel (0) target = $region5
    $region4: #{tpu_custom_call.1} parent=1 // pred_region
      _
    $region5: #{tpu_custom_call.1} parent=1 // pred_fallthru
      _
    // Predicated region
    $region6: #{tpu_custom_call.1} parent=1 // pred_check
      _
    $region7: #{tpu_custom_call.1} parent=1 // pred_check_branch
      %16 = sbr.rel (0) target = $region9
    $region8: #{tpu_custom_call.1} parent=1 // pred_region
      _
    $region9: #{tpu_custom_call.1} parent=1 // pred_fallthru
      _
    // Predicated region
    $region10: #{tpu_custom_call.1} parent=1 // pred_check
      _
    $region11: #{tpu_custom_call.1} parent=1 // pred_check_branch
      %18 = sbr.rel (0) target = $region13
    $region12: #{tpu_custom_call.1} parent=1 // pred_region
      _
    $region13: #{tpu_custom_call.1} parent=1 // pred_fallthru
      _
    // Predicated region
    $region14: #{tpu_custom_call.1} parent=1 // pred_check
      _
    $region15: #{tpu_custom_call.1} parent=1 // pred_check_branch
      %20 = sbr.rel (0) target = $region17
    $region16: #{tpu_custom_call.1} parent=1 // pred_region
      _
    $region17: #{tpu_custom_call.1} parent=1 // pred_fallthru
      _
    // Predicated region
    $region18: #{tpu_custom_call.1} parent=1 // pred_check
      _
    $region19: #{tpu_custom_call.1} parent=1 // pred_check_branch
      %22 = sbr.rel (0) target = $region21
    $region20: #{tpu_custom_call.1} parent=1 // pred_region
      _
    $region21: #{tpu_custom_call.1} parent=1 // pred_fallthru
      _
    // Predicated region
    $region22: #{tpu_custom_call.1} parent=1 // pred_check
      _
    $region23: #{tpu_custom_call.1} parent=1 // pred_check_branch
      %24 = sbr.rel (0) target = $region25
    $region24: #{tpu_custom_call.1} parent=1 // pred_region
      _
    $region25: #{tpu_custom_call.1} parent=1 // pred_fallthru
      _
    // Predicated region
    $region26: #{tpu_custom_call.1} parent=1 // pred_check
      _
    $region27: #{tpu_custom_call.1} parent=1 // pred_check_branch
      %26 = sbr.rel (0) target = $region29
    $region28: #{tpu_custom_call.1} parent=1 // pred_region
      _
    $region29: #{tpu_custom_call.1} parent=1 // pred_fallthru
      _
    %v27 = vld [vmem:[%s1] sm:$0xff]
    %v28 = vld [vmem:[%s2] sm:$0xff]
    %v29 = vld [vmem:[%s3] sm:$0xff]
    %v30 = vld [vmem:[%s4] sm:$0xff]
    %v31 = vld [vmem:[%s5] sm:$0xf]
    %v32 = vld [vmem:[%s6] sm:$0xf]
    %v33 = vlaneseq
    %v34 = vand.u32 %v33, 127
    %v35 = vadd.s32 %v34, 128
    %vm36 = vcmp.lt.s32.totalorder %v34, 0
    %v37 = vsub.s32 0, %v34
    %v38 = vsel %vm36, %v37, %v34
    %v39 = vshrl.u32 %v38, 4
    %v40 = vand.u32 %v38, 15
    %v41 = vsub.s32 0, %v40
    %v42 = vsel %vm36, %v41, %v40
    %vm43 = vcmp.lt.s32.totalorder %v35, 0
    %v44 = vsub.s32 0, %v35
    %v45 = vsel %vm43, %v44, %v35
    %v46 = vshrl.u32 %v45, 4
    %v47 = vand.u32 %v45, 15
    %v48 = vsub.s32 0, %v47
    %v49 = vsel %vm43, %v48, %v47
    %vm50 = vcmp.ne.s32.totalorder %v42, 0
    %vm51 = vcmp.ne.s32.totalorder %v49, 0
    %vm52 = vcmp.lt.s32.totalorder %v42, 0
    %vm53 = vcmp.lt.s32.totalorder %v49, 0
    %vm54 = vmand %vm52, %vm50
    %vm55 = vmand %vm53, %vm51
    %v56 = vadd.s32 %v42, 16
    %v57 = vadd.s32 %v49, 16
    %v58 = vsel %vm54, %v56, %v42
    %v59 = vsel %vm55, %v57, %v49
    %v60 = vld [vmem:[%s0] sm:$0xff]
    %62 = vset.pattern.permute.xlu0 0
    %63 = vperm.xlu0 %62, %v28
    %v64 = vpop.permute.xlu0 %63
    %v67 = vcombine.high %v60, %v60
    %vm68 = vcmask 31744
    %v70 = vsel %vm68, %v27, 0
    %vm72 = vcmask 1043456
    %v73 = vsel %vm72, %v60, 0
    %v75 = vsel %vm72, %v67, 0
    %77 = vmatprep.subr.mxu0 0.0
    %78 = vmatpush1.msra.mxu0 0.0
    %79 = vmatprep.subr.mxu0 0.0
    %80 = vmatpush1.msra.mxu0 0.0
    %81 = vmatprep.subr.mxu0 0.0
    %82 = vmatpush1.msra.mxu0 0.0
    %83 = vmatprep.subr.mxu0 0.0
    %84 = vmatpush1.msra.mxu0 0.0
    %85 = vmatprep.subr.mxu0 0.0
    %86 = vmatpush1.msra.mxu0 0.0
    %87 = vmatprep.subr.mxu0 0.0
    %88 = vmatpush1.msra.mxu0 0.0
    %89 = vmatprep.subr.mxu0 0.0
    %90 = vmatpush1.msra.mxu0 0.0
    %91 = vmatprep.subr.mxu0 0.0
    %92 = vmatpush1.msra.mxu0 0.0
    %93 = vmatprep.subr.mxu0 0.0
    %94 = vmatpush1.msra.mxu0 0.0
    %95 = vmatprep.subr.mxu0 0.0
    %96 = vmatpush1.msra.mxu0 0.0
    %97 = vmatprep.subr.mxu0 0.0
    %98 = vmatpush1.msra.mxu0 0.0
    %99 = vmatprep.subr.mxu0 0.0
    %100 = vmatpush1.msra.mxu0 0.0
    %101 = vmatprep.subr.mxu0 0.0
    %102 = vmatpush1.msra.mxu0 0.0
    %103 = vmatprep.subr.mxu0 0.0
    %104 = vmatpush1.msra.mxu0 0.0
    %105 = vmatprep.subr.mxu0 0.0
    %106 = vmatpush1.msra.mxu0 0.0
    %107 = vmatprep.subr.mxu0 %v75
    %108 = vmatpush1.msra.mxu0 %v73
    %109 = vmatprep.subr.mxu0 0.0
    %110 = vmatpush2.msra.mxu0 0.0
    %111 = vmatprep.subr.mxu0 0.0
    %112 = vmatpush2.msra.mxu0 0.0
    %113 = vmatprep.subr.mxu0 0.0
    %114 = vmatpush2.msra.mxu0 0.0
    %115 = vmatprep.subr.mxu0 0.0
    %116 = vmatpush2.msra.mxu0 0.0
    %117 = vmatprep.subr.mxu0 0.0
    %118 = vmatpush2.msra.mxu0 0.0
    %119 = vmatprep.subr.mxu0 0.0
    %120 = vmatpush2.msra.mxu0 0.0
    %121 = vmatprep.subr.mxu0 0.0
    %122 = vmatpush2.msra.mxu0 0.0
    %123 = vmatprep.subr.mxu0 0.0
    %124 = vmatpush2.msra.mxu0 0.0
    %125 = vmatprep.subr.mxu0 0.0
    %126 = vmatpush2.msra.mxu0 0.0
    %127 = vmatprep.subr.mxu0 0.0
    %128 = vmatpush2.msra.mxu0 0.0
    %129 = vmatprep.subr.mxu0 0.0
    %130 = vmatpush2.msra.mxu0 0.0
    %131 = vmatprep.subr.mxu0 0.0
    %132 = vmatpush2.msra.mxu0 0.0
    %133 = vmatprep.subr.mxu0 0.0
    %134 = vmatpush2.msra.mxu0 0.0
    %135 = vmatprep.subr.mxu0 0.0
    %136 = vmatpush2.msra.mxu0 0.0
    %137 = vmatprep.subr.mxu0 0.0
    %138 = vmatpush2.msra.mxu0 0.0
    %139 = vmatprep.subr.mxu0 0.0
    %140 = vmatpush2.msra.mxu0 0.0
    %141 = vmatprep.mubr.f32.mxu0 0.0
    %142 = vmatmul.mubr.f32.gmra.mxu0 %v70
    %v143 = vpop.f32.mrf.mxu0
    %v144 = vadd.f32 %v64, %v143
    %v145 = vpop.f32.mrf.mxu0
    %v146 = vadd.f32 %v64, %v145
    %147 = vdwg.mxu0
    %vm148 = vcmp.ge.s32.totalorder %v58, 4294967295
    %vm149 = vcmp.ge.s32.totalorder %v59, 4294967295
    %vm150 = vcmp.lt.s32.totalorder %v58, 15
    %vm151 = vcmp.lt.s32.totalorder %v59, 15
    %vm152 = vmand %vm148, %vm150
    %vm153 = vmand %vm149, %vm151
    %v154 = vsel %vm152, 1, 0
    %v155 = vsel %vm153, 1, 0
    %vm156 = vcmp.eq.s32.totalorder %v154, 1
    %vm157 = vcmp.eq.s32.totalorder %v155, 1
    %v158 = vsel %vm156, %v144, 0.0
    %v159 = vsel %vm157, %v146, 0.0
    %vm160 = vcmp.ge.s32.totalorder %v58, 1
    %vm161 = vcmp.ge.s32.totalorder %v59, 1
    %vm162 = vcmp.lt.s32.totalorder %v58, 17
    %vm163 = vcmp.lt.s32.totalorder %v59, 17
    %vm164 = vmand %vm160, %vm162
    %vm165 = vmand %vm161, %vm163
    %v166 = vsel %vm164, 1, 0
    %v167 = vsel %vm165, 1, 0
    %vm168 = vcmp.eq.s32.totalorder %v166, 1
    %vm169 = vcmp.eq.s32.totalorder %v167, 1
    %v170 = vsel %vm168, %v144, 0.0
    %v171 = vsel %vm169, %v146, 0.0
    %174 = vrot.lane.b32.xlu0 %v158, 17
    %v175 = vpop.permute.xlu0 %174
    %176 = vrot.lane.b32.xlu0 %v159, 17
    %v177 = vpop.permute.xlu0 %176
    %vm178 = vcmask 138240
    %v179 = vsel %vm178, %v175, %v177
    %v182 = vsel %vm178, 0.0, %v175
    %184 = vset.pattern.permute.xlu0 0
    %185 = vperm.xlu0 %184, %v29
    %v186 = vpop.permute.xlu0 %185
    %v188 = vmul.f32 %v182, %v186
    %v189 = vmul.f32 %v179, %v186
    %v190 = vadd.f32 %v188, 0.0
    %v191 = vadd.f32 %v189, 0.0
    %194 = vrot.lane.b32.xlu0 %v144, 16
    %v195 = vpop.permute.xlu0 %194
    %196 = vrot.lane.b32.xlu0 %v146, 16
    %v197 = vpop.permute.xlu0 %196
    %vm198 = vcmask 130048
    %v199 = vsel %vm198, %v195, %v197
    %v202 = vsel %vm198, 0.0, %v195
    %203 = vset.pattern.permute.xlu0 1
    %204 = vperm.xlu0 %203, %v29
    %v205 = vpop.permute.xlu0 %204
    %v207 = vmul.f32 %v202, %v205
    %v208 = vmul.f32 %v199, %v205
    %v209 = vadd.f32 %v190, %v207
    %v210 = vadd.f32 %v191, %v208
    %213 = vrot.lane.b32.xlu0 %v170, 15
    %v214 = vpop.permute.xlu0 %213
    %215 = vrot.lane.b32.xlu0 %v171, 15
    %v216 = vpop.permute.xlu0 %215
    %vm217 = vcmask 121856
    %v218 = vsel %vm217, %v214, %v216
    %v221 = vsel %vm217, 0.0, %v214
    %222 = vset.pattern.permute.xlu0 2
    %223 = vperm.xlu0 %222, %v29
    %v224 = vpop.permute.xlu0 %223
    %v226 = vmul.f32 %v221, %v224
    %v227 = vmul.f32 %v218, %v224
    %v228 = vadd.f32 %v209, %v226
    %v229 = vadd.f32 %v210, %v227
    %230 = vrot.lane.b32.xlu0 %v158, 1
    %v231 = vpop.permute.xlu0 %230
    %232 = vrot.lane.b32.xlu0 %v159, 1
    %v233 = vpop.permute.xlu0 %232
    %vm234 = vcmask 7168
    %v235 = vsel %vm234, %v231, %v233
    %v238 = vsel %vm234, 0.0, %v231
    %239 = vset.pattern.permute.xlu0 3
    %240 = vperm.xlu0 %239, %v29
    %v241 = vpop.permute.xlu0 %240
    %v243 = vmul.f32 %v238, %v241
    %v244 = vmul.f32 %v235, %v241
    %v245 = vadd.f32 %v228, %v243
    %v246 = vadd.f32 %v229, %v244
    %247 = vset.pattern.permute.xlu0 4
    %248 = vperm.xlu0 %247, %v29
    %v249 = vpop.permute.xlu0 %248
    %v251 = vmul.f32 %v144, %v249
    %v252 = vmul.f32 %v146, %v249
    %v253 = vadd.f32 %v245, %v251
    %v254 = vadd.f32 %v246, %v252
    %255 = vrot.lane.b32.xlu0 %v170, 127
    %v256 = vpop.permute.xlu0 %255
    %257 = vrot.lane.b32.xlu0 %v171, 127
    %v258 = vpop.permute.xlu0 %257
    %vm259 = vcmask 1039360
    %v260 = vsel %vm259, %v256, %v258
    %v263 = vsel %vm259, %v258, 0.0
    %264 = vset.pattern.permute.xlu0 5
    %265 = vperm.xlu0 %264, %v29
    %v266 = vpop.permute.xlu0 %265
    %v268 = vmul.f32 %v260, %v266
    %v269 = vmul.f32 %v263, %v266
    %v270 = vadd.f32 %v253, %v268
    %v271 = vadd.f32 %v254, %v269
    %272 = vrot.lane.b32.xlu0 %v158, 113
    %v273 = vpop.permute.xlu0 %272
    %274 = vrot.lane.b32.xlu0 %v159, 113
    %v275 = vpop.permute.xlu0 %274
    %vm276 = vcmask 924672
    %v277 = vsel %vm276, %v273, %v275
    %v280 = vsel %vm276, %v275, 0.0
    %281 = vset.pattern.permute.xlu0 6
    %282 = vperm.xlu0 %281, %v29
    %v283 = vpop.permute.xlu0 %282
    %v285 = vmul.f32 %v277, %v283
    %v286 = vmul.f32 %v280, %v283
    %v287 = vadd.f32 %v270, %v285
    %v288 = vadd.f32 %v271, %v286
    %289 = vrot.lane.b32.xlu0 %v144, 112
    %v290 = vpop.permute.xlu0 %289
    %291 = vrot.lane.b32.xlu0 %v146, 112
    %v292 = vpop.permute.xlu0 %291
    %vm293 = vcmask 916480
    %v294 = vsel %vm293, %v290, %v292
    %v297 = vsel %vm293, %v292, 0.0
    %298 = vset.pattern.permute.xlu0 7
    %299 = vperm.xlu0 %298, %v29
    %v300 = vpop.permute.xlu0 %299
    %v302 = vmul.f32 %v294, %v300
    %v303 = vmul.f32 %v297, %v300
    %v304 = vadd.f32 %v287, %v302
    %v305 = vadd.f32 %v288, %v303
    %306 = vrot.lane.b32.xlu0 %v170, 111
    %v307 = vpop.permute.xlu0 %306
    %308 = vrot.lane.b32.xlu0 %v171, 111
    %v309 = vpop.permute.xlu0 %308
    %vm310 = vcmask 908288
    %v311 = vsel %vm310, %v307, %v309
    %v314 = vsel %vm310, %v309, 0.0
    %315 = vset.pattern.permute.xlu0 8
    %316 = vperm.xlu0 %315, %v29
    %v317 = vpop.permute.xlu0 %316
    %v319 = vmul.f32 %v311, %v317
    %v320 = vmul.f32 %v314, %v317
    %v321 = vadd.f32 %v304, %v319
    %v322 = vadd.f32 %v305, %v320
    %324 = vset.pattern.permute.xlu0 0
    %325 = vperm.xlu0 %324, %v30
    %v326 = vpop.permute.xlu0 %325
    %v328 = vadd.f32 %v321, %v326
    %v329 = vadd.f32 %v322, %v326
    %v330 = vmul.f32 %v328, 0.5
    %v331 = vmul.f32 %v329, 0.5
    %v332 = vmul.f32 %v328, 0.70710677
    %v333 = vmul.f32 %v329, 0.70710677
    %vm334 = vcmp.ge.f32.partialorder %v332, 0.0
    %vm335 = vcmp.ge.f32.partialorder %v333, 0.0
    %v336 = vsel %vm334, 1.0, -1.0
    %v337 = vsel %vm335, 1.0, -1.0
    %v338 = vand.u32 2147483647, %v332
    %v339 = vand.u32 2147483647, %v333
    %v340 = vmul.f32 %v338, 0.3275911
    %v341 = vmul.f32 %v339, 0.3275911
    %v342 = vadd.f32 %v340, 1.0
    %v343 = vadd.f32 %v341, 1.0
    %v344 = vrcp.pop %v342
    %v345 = vrcp.pop %v343
    %v346 = vmul.f32 %v342, %v344
    %v347 = vmul.f32 %v343, %v345
    %v348 = vsub.f32 2.0, %v346
    %v349 = vsub.f32 2.0, %v347
    %v350 = vmul.f32 %v344, %v348
    %v351 = vmul.f32 %v345, %v349
    %v352 = vmul.f32 %v350, 1.0614054
    %v353 = vmul.f32 %v351, 1.0614054
    %v354 = vadd.f32 %v352, -1.4531521
    %v355 = vadd.f32 %v353, -1.4531521
    %v356 = vmul.f32 %v354, %v350
    %v357 = vmul.f32 %v355, %v351
    %v358 = vadd.f32 %v356, 1.4214138
    %v359 = vadd.f32 %v357, 1.4214138
    %v360 = vmul.f32 %v358, %v350
    %v361 = vmul.f32 %v359, %v351
    %v362 = vadd.f32 %v360, -0.28449672
    %v363 = vadd.f32 %v361, -0.28449672
    %v364 = vmul.f32 %v362, %v350
    %v365 = vmul.f32 %v363, %v351
    %v366 = vadd.f32 %v364, 0.2548296
    %v367 = vadd.f32 %v365, 0.2548296
    %v368 = vmul.f32 %v366, %v350
    %v369 = vmul.f32 %v367, %v351
    %v370 = vsub.f32 0.0, %v338
    %v371 = vsub.f32 0.0, %v339
    %v372 = vmul.f32 %v370, %v338
    %v373 = vmul.f32 %v371, %v339
    %v374 = vmul.f32 %v372, 1.442695
    %v375 = vpow.pop %v374
    %v376 = vmul.f32 %v373, 1.442695
    %v377 = vpow.pop %v376
    %v378 = vmul.f32 %v368, %v375
    %v379 = vmul.f32 %v369, %v377
    %v380 = vsub.f32 1.0, %v378
    %v381 = vsub.f32 1.0, %v379
    %v382 = vmul.f32 %v336, %v380
    %v383 = vmul.f32 %v337, %v381
    %v384 = vadd.f32 %v382, 1.0
    %v385 = vadd.f32 %v383, 1.0
    %v386 = vmul.f32 %v330, %v384
    %v387 = vmul.f32 %v331, %v385
    %389 = vset.pattern.permute.xlu0 0
    %390 = vperm.xlu0 %389, %v32
    %v391 = vpop.permute.xlu0 %390
    %vm393 = vcmask 64512
    %v395 = vsel %vm393, %v31, 0
    %397 = vmatprep.subr.mxu0 0.0
    %398 = vmatpush1.msra.mxu0 0.0
    %399 = vmatprep.subr.mxu0 0.0
    %400 = vmatpush1.msra.mxu0 0.0
    %401 = vmatprep.subr.mxu0 0.0
    %402 = vmatpush1.msra.mxu0 0.0
    %403 = vmatprep.subr.mxu0 0.0
    %404 = vmatpush1.msra.mxu0 0.0
    %405 = vmatprep.subr.mxu0 0.0
    %406 = vmatpush1.msra.mxu0 0.0
    %407 = vmatprep.subr.mxu0 0.0
    %408 = vmatpush1.msra.mxu0 0.0
    %409 = vmatprep.subr.mxu0 0.0
    %410 = vmatpush1.msra.mxu0 0.0
    %411 = vmatprep.subr.mxu0 0.0
    %412 = vmatpush1.msra.mxu0 0.0
    %413 = vmatprep.subr.mxu0 0.0
    %414 = vmatpush1.msra.mxu0 0.0
    %415 = vmatprep.subr.mxu0 0.0
    %416 = vmatpush1.msra.mxu0 0.0
    %417 = vmatprep.subr.mxu0 0.0
    %418 = vmatpush1.msra.mxu0 0.0
    %419 = vmatprep.subr.mxu0 0.0
    %420 = vmatpush1.msra.mxu0 0.0
    %421 = vmatprep.subr.mxu0 0.0
    %422 = vmatpush1.msra.mxu0 0.0
    %423 = vmatprep.subr.mxu0 0.0
    %424 = vmatpush1.msra.mxu0 0.0
    %425 = vmatprep.subr.mxu0 0.0
    %426 = vmatpush1.msra.mxu0 0.0
    %427 = vmatprep.subr.mxu0 %v387
    %428 = vmatpush1.msra.mxu0 %v386
    %429 = vmatprep.subr.mxu0 0.0
    %430 = vmatpush2.msra.mxu0 0.0
    %431 = vmatprep.subr.mxu0 0.0
    %432 = vmatpush2.msra.mxu0 0.0
    %433 = vmatprep.subr.mxu0 0.0
    %434 = vmatpush2.msra.mxu0 0.0
    %435 = vmatprep.subr.mxu0 0.0
    %436 = vmatpush2.msra.mxu0 0.0
    %437 = vmatprep.subr.mxu0 0.0
    %438 = vmatpush2.msra.mxu0 0.0
    %439 = vmatprep.subr.mxu0 0.0
    %440 = vmatpush2.msra.mxu0 0.0
    %441 = vmatprep.subr.mxu0 0.0
    %442 = vmatpush2.msra.mxu0 0.0
    %443 = vmatprep.subr.mxu0 0.0
    %444 = vmatpush2.msra.mxu0 0.0
    %445 = vmatprep.subr.mxu0 0.0
    %446 = vmatpush2.msra.mxu0 0.0
    %447 = vmatprep.subr.mxu0 0.0
    %448 = vmatpush2.msra.mxu0 0.0
    %449 = vmatprep.subr.mxu0 0.0
    %450 = vmatpush2.msra.mxu0 0.0
    %451 = vmatprep.subr.mxu0 0.0
    %452 = vmatpush2.msra.mxu0 0.0
    %453 = vmatprep.subr.mxu0 0.0
    %454 = vmatpush2.msra.mxu0 0.0
    %455 = vmatprep.subr.mxu0 0.0
    %456 = vmatpush2.msra.mxu0 0.0
    %457 = vmatprep.subr.mxu0 0.0
    %458 = vmatpush2.msra.mxu0 0.0
    %459 = vmatprep.subr.mxu0 0.0
    %460 = vmatpush2.msra.mxu0 0.0
    %461 = vmatprep.mubr.f32.mxu0 0.0
    %462 = vmatmul.mubr.f32.gmra.mxu0 %v395
    %v463 = vpop.f32.mrf.mxu0
    %v464 = vadd.f32 %v391, %v463
    %v465 = vpop.f32.mrf.mxu0
    %v466 = vadd.f32 %v391, %v465
    %467 = vdwg.mxu0
    %v470 = vcombine.low %v464, %v466
    %472 = vst [vmem:[#allocation2] sm:$0xff] %v470
    %s473 = scalar_lea.vmem %s0, 8
    %v474 = vld [vmem:[%s473] sm:$0xff]
    %v476 = vcombine.high %v474, %v474
    %v477 = vsel %vm72, %v474, 0
    %v479 = vsel %vm72, %v476, 0
    %481 = vmatprep.subr.mxu0 0.0
    %482 = vmatpush1.msra.mxu0 0.0
    %483 = vmatprep.subr.mxu0 0.0
    %484 = vmatpush1.msra.mxu0 0.0
    %485 = vmatprep.subr.mxu0 0.0
    %486 = vmatpush1.msra.mxu0 0.0
    %487 = vmatprep.subr.mxu0 0.0
    %488 = vmatpush1.msra.mxu0 0.0
    %489 = vmatprep.subr.mxu0 0.0
    %490 = vmatpush1.msra.mxu0 0.0
    %491 = vmatprep.subr.mxu0 0.0
    %492 = vmatpush1.msra.mxu0 0.0
    %493 = vmatprep.subr.mxu0 0.0
    %494 = vmatpush1.msra.mxu0 0.0
    %495 = vmatprep.subr.mxu0 0.0
    %496 = vmatpush1.msra.mxu0 0.0
    %497 = vmatprep.subr.mxu0 0.0
    %498 = vmatpush1.msra.mxu0 0.0
    %499 = vmatprep.subr.mxu0 0.0
    %500 = vmatpush1.msra.mxu0 0.0
    %501 = vmatprep.subr.mxu0 0.0
    %502 = vmatpush1.msra.mxu0 0.0
    %503 = vmatprep.subr.mxu0 0.0
    %504 = vmatpush1.msra.mxu0 0.0
    %505 = vmatprep.subr.mxu0 0.0
    %506 = vmatpush1.msra.mxu0 0.0
    %507 = vmatprep.subr.mxu0 0.0
    %508 = vmatpush1.msra.mxu0 0.0
    %509 = vmatprep.subr.mxu0 0.0
    %510 = vmatpush1.msra.mxu0 0.0
    %511 = vmatprep.subr.mxu0 %v479
    %512 = vmatpush1.msra.mxu0 %v477
    %513 = vmatprep.subr.mxu0 0.0
    %514 = vmatpush2.msra.mxu0 0.0
    %515 = vmatprep.subr.mxu0 0.0
    %516 = vmatpush2.msra.mxu0 0.0
    %517 = vmatprep.subr.mxu0 0.0
    %518 = vmatpush2.msra.mxu0 0.0
    %519 = vmatprep.subr.mxu0 0.0
    %520 = vmatpush2.msra.mxu0 0.0
    %521 = vmatprep.subr.mxu0 0.0
    %522 = vmatpush2.msra.mxu0 0.0
    %523 = vmatprep.subr.mxu0 0.0
    %524 = vmatpush2.msra.mxu0 0.0
    %525 = vmatprep.subr.mxu0 0.0
    %526 = vmatpush2.msra.mxu0 0.0
    %527 = vmatprep.subr.mxu0 0.0
    %528 = vmatpush2.msra.mxu0 0.0
    %529 = vmatprep.subr.mxu0 0.0
    %530 = vmatpush2.msra.mxu0 0.0
    %531 = vmatprep.subr.mxu0 0.0
    %532 = vmatpush2.msra.mxu0 0.0
    %533 = vmatprep.subr.mxu0 0.0
    %534 = vmatpush2.msra.mxu0 0.0
    %535 = vmatprep.subr.mxu0 0.0
    %536 = vmatpush2.msra.mxu0 0.0
    %537 = vmatprep.subr.mxu0 0.0
    %538 = vmatpush2.msra.mxu0 0.0
    %539 = vmatprep.subr.mxu0 0.0
    %540 = vmatpush2.msra.mxu0 0.0
    %541 = vmatprep.subr.mxu0 0.0
    %542 = vmatpush2.msra.mxu0 0.0
    %543 = vmatprep.subr.mxu0 0.0
    %544 = vmatpush2.msra.mxu0 0.0
    %545 = vmatprep.mubr.f32.mxu0 0.0
    %546 = vmatmul.mubr.f32.gmra.mxu0 %v70
    %v547 = vpop.f32.mrf.mxu0
    %v548 = vadd.f32 %v64, %v547
    %v549 = vpop.f32.mrf.mxu0
    %v550 = vadd.f32 %v64, %v549
    %551 = vdwg.mxu0
    %v552 = vsel %vm156, %v548, 0.0
    %v553 = vsel %vm157, %v550, 0.0
    %v554 = vsel %vm168, %v548, 0.0
    %v555 = vsel %vm169, %v550, 0.0
    %558 = vrot.lane.b32.xlu0 %v552, 17
    %v559 = vpop.permute.xlu0 %558
    %560 = vrot.lane.b32.xlu0 %v553, 17
    %v561 = vpop.permute.xlu0 %560
    %v562 = vsel %vm178, %v559, %v561
    %v565 = vsel %vm178, 0.0, %v559
    %v566 = vmul.f32 %v565, %v186
    %v567 = vmul.f32 %v562, %v186
    %v568 = vadd.f32 %v566, 0.0
    %v569 = vadd.f32 %v567, 0.0
    %572 = vrot.lane.b32.xlu0 %v548, 16
    %v573 = vpop.permute.xlu0 %572
    %574 = vrot.lane.b32.xlu0 %v550, 16
    %v575 = vpop.permute.xlu0 %574
    %v576 = vsel %vm198, %v573, %v575
    %v579 = vsel %vm198, 0.0, %v573
    %v580 = vmul.f32 %v579, %v205
    %v581 = vmul.f32 %v576, %v205
    %v582 = vadd.f32 %v568, %v580
    %v583 = vadd.f32 %v569, %v581
    %586 = vrot.lane.b32.xlu0 %v554, 15
    %v587 = vpop.permute.xlu0 %586
    %588 = vrot.lane.b32.xlu0 %v555, 15
    %v589 = vpop.permute.xlu0 %588
    %v590 = vsel %vm217, %v587, %v589
    %v593 = vsel %vm217, 0.0, %v587
    %v594 = vmul.f32 %v593, %v224
    %v595 = vmul.f32 %v590, %v224
    %v596 = vadd.f32 %v582, %v594
    %v597 = vadd.f32 %v583, %v595
    %598 = vrot.lane.b32.xlu0 %v552, 1
    %v599 = vpop.permute.xlu0 %598
    %600 = vrot.lane.b32.xlu0 %v553, 1
    %v601 = vpop.permute.xlu0 %600
    %v602 = vsel %vm234, %v599, %v601
    %v605 = vsel %vm234, 0.0, %v599
    %v606 = vmul.f32 %v605, %v241
    %v607 = vmul.f32 %v602, %v241
    %v608 = vadd.f32 %v596, %v606
    %v609 = vadd.f32 %v597, %v607
    %v610 = vmul.f32 %v548, %v249
    %v611 = vmul.f32 %v550, %v249
    %v612 = vadd.f32 %v608, %v610
    %v613 = vadd.f32 %v609, %v611
    %614 = vrot.lane.b32.xlu0 %v554, 127
    %v615 = vpop.permute.xlu0 %614
    %616 = vrot.lane.b32.xlu0 %v555, 127
    %v617 = vpop.permute.xlu0 %616
    %v618 = vsel %vm259, %v615, %v617
    %v621 = vsel %vm259, %v617, 0.0
    %v622 = vmul.f32 %v618, %v266
    %v623 = vmul.f32 %v621, %v266
    %v624 = vadd.f32 %v612, %v622
    %v625 = vadd.f32 %v613, %v623
    %626 = vrot.lane.b32.xlu0 %v552, 113
    %v627 = vpop.permute.xlu0 %626
    %628 = vrot.lane.b32.xlu0 %v553, 113
    %v629 = vpop.permute.xlu0 %628
    %v630 = vsel %vm276, %v627, %v629
    %v633 = vsel %vm276, %v629, 0.0
    %v634 = vmul.f32 %v630, %v283
    %v635 = vmul.f32 %v633, %v283
    %v636 = vadd.f32 %v624, %v634
    %v637 = vadd.f32 %v625, %v635
    %638 = vrot.lane.b32.xlu0 %v548, 112
    %v639 = vpop.permute.xlu0 %638
    %640 = vrot.lane.b32.xlu0 %v550, 112
    %v641 = vpop.permute.xlu0 %640
    %v642 = vsel %vm293, %v639, %v641
    %v645 = vsel %vm293, %v641, 0.0
    %v646 = vmul.f32 %v642, %v300
    %v647 = vmul.f32 %v645, %v300
    %v648 = vadd.f32 %v636, %v646
    %v649 = vadd.f32 %v637, %v647
    %650 = vrot.lane.b32.xlu0 %v554, 111
    %v651 = vpop.permute.xlu0 %650
    %652 = vrot.lane.b32.xlu0 %v555, 111
    %v653 = vpop.permute.xlu0 %652
    %v654 = vsel %vm310, %v651, %v653
    %v657 = vsel %vm310, %v653, 0.0
    %v658 = vmul.f32 %v654, %v317
    %v659 = vmul.f32 %v657, %v317
    %v660 = vadd.f32 %v648, %v658
    %v661 = vadd.f32 %v649, %v659
    %v662 = vadd.f32 %v660, %v326
    %v663 = vadd.f32 %v661, %v326
    %v664 = vmul.f32 %v662, 0.5
    %v665 = vmul.f32 %v663, 0.5
    %v666 = vmul.f32 %v662, 0.70710677
    %v667 = vmul.f32 %v663, 0.70710677
    %vm668 = vcmp.ge.f32.partialorder %v666, 0.0
    %vm669 = vcmp.ge.f32.partialorder %v667, 0.0
    %v670 = vsel %vm668, 1.0, -1.0
    %v671 = vsel %vm669, 1.0, -1.0
    %v672 = vand.u32 2147483647, %v666
    %v673 = vand.u32 2147483647, %v667
    %v674 = vmul.f32 %v672, 0.3275911
    %v675 = vmul.f32 %v673, 0.3275911
    %v676 = vadd.f32 %v674, 1.0
    %v677 = vadd.f32 %v675, 1.0
    %v678 = vrcp.pop %v676
    %v679 = vrcp.pop %v677
    %v680 = vmul.f32 %v676, %v678
    %v681 = vmul.f32 %v677, %v679
    %v682 = vsub.f32 2.0, %v680
    %v683 = vsub.f32 2.0, %v681
    %v684 = vmul.f32 %v678, %v682
    %v685 = vmul.f32 %v679, %v683
    %v686 = vmul.f32 %v684, 1.0614054
    %v687 = vmul.f32 %v685, 1.0614054
    %v688 = vadd.f32 %v686, -1.4531521
    %v689 = vadd.f32 %v687, -1.4531521
    %v690 = vmul.f32 %v688, %v684
    %v691 = vmul.f32 %v689, %v685
    %v692 = vadd.f32 %v690, 1.4214138
    %v693 = vadd.f32 %v691, 1.4214138
    %v694 = vmul.f32 %v692, %v684
    %v695 = vmul.f32 %v693, %v685
    %v696 = vadd.f32 %v694, -0.28449672
    %v697 = vadd.f32 %v695, -0.28449672
    %v698 = vmul.f32 %v696, %v684
    %v699 = vmul.f32 %v697, %v685
    %v700 = vadd.f32 %v698, 0.2548296
    %v701 = vadd.f32 %v699, 0.2548296
    %v702 = vmul.f32 %v700, %v684
    %v703 = vmul.f32 %v701, %v685
    %v704 = vsub.f32 0.0, %v672
    %v705 = vsub.f32 0.0, %v673
    %v706 = vmul.f32 %v704, %v672
    %v707 = vmul.f32 %v705, %v673
    %v708 = vmul.f32 %v706, 1.442695
    %v709 = vpow.pop %v708
    %v710 = vmul.f32 %v707, 1.442695
    %v711 = vpow.pop %v710
    %v712 = vmul.f32 %v702, %v709
    %v713 = vmul.f32 %v703, %v711
    %v714 = vsub.f32 1.0, %v712
    %v715 = vsub.f32 1.0, %v713
    %v716 = vmul.f32 %v670, %v714
    %v717 = vmul.f32 %v671, %v715
    %v718 = vadd.f32 %v716, 1.0
    %v719 = vadd.f32 %v717, 1.0
    %v720 = vmul.f32 %v664, %v718
    %v721 = vmul.f32 %v665, %v719
    %722 = vmatprep.subr.mxu0 0.0
    %723 = vmatpush1.msra.mxu0 0.0
    %724 = vmatprep.subr.mxu0 0.0
    %725 = vmatpush1.msra.mxu0 0.0
    %726 = vmatprep.subr.mxu0 0.0
    %727 = vmatpush1.msra.mxu0 0.0
    %728 = vmatprep.subr.mxu0 0.0
    %729 = vmatpush1.msra.mxu0 0.0
    %730 = vmatprep.subr.mxu0 0.0
    %731 = vmatpush1.msra.mxu0 0.0
    %732 = vmatprep.subr.mxu0 0.0
    %733 = vmatpush1.msra.mxu0 0.0
    %734 = vmatprep.subr.mxu0 0.0
    %735 = vmatpush1.msra.mxu0 0.0
    %736 = vmatprep.subr.mxu0 0.0
    %737 = vmatpush1.msra.mxu0 0.0
    %738 = vmatprep.subr.mxu0 0.0
    %739 = vmatpush1.msra.mxu0 0.0
    %740 = vmatprep.subr.mxu0 0.0
    %741 = vmatpush1.msra.mxu0 0.0
    %742 = vmatprep.subr.mxu0 0.0
    %743 = vmatpush1.msra.mxu0 0.0
    %744 = vmatprep.subr.mxu0 0.0
    %745 = vmatpush1.msra.mxu0 0.0
    %746 = vmatprep.subr.mxu0 0.0
    %747 = vmatpush1.msra.mxu0 0.0
    %748 = vmatprep.subr.mxu0 0.0
    %749 = vmatpush1.msra.mxu0 0.0
    %750 = vmatprep.subr.mxu0 0.0
    %751 = vmatpush1.msra.mxu0 0.0
    %752 = vmatprep.subr.mxu0 %v721
    %753 = vmatpush1.msra.mxu0 %v720
    %754 = vmatprep.subr.mxu0 0.0
    %755 = vmatpush2.msra.mxu0 0.0
    %756 = vmatprep.subr.mxu0 0.0
    %757 = vmatpush2.msra.mxu0 0.0
    %758 = vmatprep.subr.mxu0 0.0
    %759 = vmatpush2.msra.mxu0 0.0
    %760 = vmatprep.subr.mxu0 0.0
    %761 = vmatpush2.msra.mxu0 0.0
    %762 = vmatprep.subr.mxu0 0.0
    %763 = vmatpush2.msra.mxu0 0.0
    %764 = vmatprep.subr.mxu0 0.0
    %765 = vmatpush2.msra.mxu0 0.0
    %766 = vmatprep.subr.mxu0 0.0
    %767 = vmatpush2.msra.mxu0 0.0
    %768 = vmatprep.subr.mxu0 0.0
    %769 = vmatpush2.msra.mxu0 0.0
    %770 = vmatprep.subr.mxu0 0.0
    %771 = vmatpush2.msra.mxu0 0.0
    %772 = vmatprep.subr.mxu0 0.0
    %773 = vmatpush2.msra.mxu0 0.0
    %774 = vmatprep.subr.mxu0 0.0
    %775 = vmatpush2.msra.mxu0 0.0
    %776 = vmatprep.subr.mxu0 0.0
    %777 = vmatpush2.msra.mxu0 0.0
    %778 = vmatprep.subr.mxu0 0.0
    %779 = vmatpush2.msra.mxu0 0.0
    %780 = vmatprep.subr.mxu0 0.0
    %781 = vmatpush2.msra.mxu0 0.0
    %782 = vmatprep.subr.mxu0 0.0
    %783 = vmatpush2.msra.mxu0 0.0
    %784 = vmatprep.subr.mxu0 0.0
    %785 = vmatpush2.msra.mxu0 0.0
    %786 = vmatprep.mubr.f32.mxu0 0.0
    %787 = vmatmul.mubr.f32.gmra.mxu0 %v395
    %v788 = vpop.f32.mrf.mxu0
    %v789 = vadd.f32 %v391, %v788
    %v790 = vpop.f32.mrf.mxu0
    %v791 = vadd.f32 %v391, %v790
    %792 = vdwg.mxu0
    %v795 = vcombine.low %v789, %v791
    %s797 = scalar_lea.vmem [#allocation2], 8
    %798 = vst [vmem:[%s797] sm:$0xff] %v795
    // Predicated region
    $region30: #{tpu_custom_call.1} parent=1 // pred_check
      _
    $region31: #{tpu_custom_call.1} parent=1 // pred_check_branch
      %800 = sbr.rel (0) target = $region33
    $region32: #{tpu_custom_call.1} parent=1 // pred_region
      %s802 = ssub.s32 256, 256
      %803 = vsyncadd [#allocation3], %s802
      %s804 = sshll.u32 [#allocation2], 4
      %s805 = int_to_ptr.vmem [resolvable:$true] %s804
      %810 = dma.vmem_to_hbm [thread:$0]  %s805, 256, %s7, [#allocation3], 128, 128, 8
    $region33: #{tpu_custom_call.1} parent=1 // pred_fallthru
      _
    // Predicated region
    $region34: #{tpu_custom_call.1} parent=1 // pred_check
      _
    $region35: #{tpu_custom_call.1} parent=1 // pred_check_branch
      %812 = sbr.rel (0) target = $region37
    $region36: #{tpu_custom_call.1} parent=1 // pred_region
      %813 = dma.done [#allocation3], 256
    $region37: #{tpu_custom_call.1} parent=1 // pred_fallthru
      _
    %814 = vsyncpa [#allocation3], 1

</llo_original>
